<compile_context>
chip_gen: v5e
topology: v5e:2x2
jax: 0.10.0
libtpu: 0.0.40
codegen_flags: <defaults>
</compile_context>

<pallas_src>
import jax
import jax.numpy as jnp
from jax.experimental import pallas as pl


# ---------------------------------------------------------------------------
# Kernel: single invocation, whole batch, (B, H, S) layout end-to-end.
#   single-step GRU -> encoder attention (tanh/softmax) -> context -> pointer logits
# ---------------------------------------------------------------------------
def _pointer_kernel(static_ref, x_ref, h_ref, w_gru_ref, w_apv_ref,
                    probs_ref, hh_out_ref):
    B, H, S = static_ref.shape

    # ---- single-step GRU: ONE fused (B,2H)@(2H,4H) MXU matmul -----------------
    # packed columns of g: [ r_pre | z_pre | gx_n | gh_n ]  (biases folded in)
    x = x_ref[...]                                   # (B, H)  decoder_hidden
    h = h_ref[...]                                   # (B, H)  previous hidden
    w_gru = w_gru_ref[...]                           # (2H+1, 4H), last row = bias
    xh = jnp.concatenate([x, h], axis=1)             # (B, 2H)
    g = jnp.dot(xh, w_gru[0:2 * H, :],
                preferred_element_type=jnp.float32) + w_gru[2 * H:2 * H + 1, :]
    r = jax.nn.sigmoid(g[:, 0:H])
    z = jax.nn.sigmoid(g[:, H:2 * H])
    n = jnp.tanh(g[:, 2 * H:3 * H] + r * g[:, 3 * H:4 * H])
    h_new = (1.0 - z) * n + z * h                    # (B, H) == rnn_out == new last_hh
    hh_out_ref[...] = h_new

    # ---- packed attention / pointer weights -----------------------------------
    static = static_ref[...]                         # (B, H, S)
    w = w_apv_ref[...]                               # (2H, 2H+2)
    w_sp = w[:, 0:H]                                 # (2H, H) = [Wa_s ; Wp_s]
    w_ah = w[0:H, H:2 * H]                           # (H, H)  = Wa_h^T
    w_ph = w[H:2 * H, H:2 * H]                       # (H, H)  = Wp_h^T
    va = w[0:H, 2 * H:2 * H + 1]                     # (H, 1)
    vp = w[0:H, 2 * H + 1:2 * H + 2]                 # (H, 1)

    # ---- fused static projections: one batched MXU matmul feeds both branches -
    w_sp_b = jnp.broadcast_to(w_sp[None, :, :], (B, 2 * H, H))
    proj = jax.lax.dot_general(
        w_sp_b, static,
        dimension_numbers=(((2,), (1,)), ((0,), (0,))),
        preferred_element_type=jnp.float32)          # (B, 2H, S)
    proj_a = proj[:, 0:H, :]                         # attention branch (B, H, S)
    proj_p = proj[:, H:2 * H, :]                     # pointer   branch (B, H, S)

    # ---- encoder attention: softmax_S( v_a . tanh(Wa [static ; h_new]) ) ------
    h_proj = jnp.dot(h_new, w_ah, preferred_element_type=jnp.float32)   # (B, H)
    att = jnp.tanh(proj_a + h_proj[:, :, None])                         # (B, H, S)
    scores = jnp.sum(att * va[None, :, :], axis=1)                      # (B, S) lane-dense
    scores = scores - jnp.max(scores, axis=1, keepdims=True)
    e = jnp.exp(scores)
    attn = e / jnp.sum(e, axis=1, keepdims=True)                        # exact softmax

    # ---- context = sum_S attn * static  -> (B, H)  (lane reduce over S) -------
    context = jnp.sum(attn[:, None, :] * static, axis=2)                # (B, H)

    # ---- pointer logits: v_p . tanh(Wp [static ; context]) --------------------
    c_proj = jnp.dot(context, w_ph, preferred_element_type=jnp.float32)  # (B, H)
    ptr = jnp.tanh(proj_p + c_proj[:, :, None])                          # (B, H, S)
    # NOTE: these are pre-softmax pointer scores (matches the PyTorch module);
    # the caller applies masking/softmax exactly once.
    probs_ref[...] = jnp.sum(ptr * vp[None, :, :], axis=1)               # (B, S)


# ---------------------------------------------------------------------------
# One-time parameter packing (hoisted out of the hot path).
# ---------------------------------------------------------------------------
def prepare_params(params):
    H = params["gru_w_ih"].shape[1]
    w_ih = params["gru_w_ih"]          # (3H, H) rows = [W_ir; W_iz; W_in]
    w_hh = params["gru_w_hh"]          # (3H, H)
    b_ih = params["gru_b_ih"]          # (3H,)
    b_hh = params["gru_b_hh"]          # (3H,)

    # Block GRU weight: [x|h] @ W -> columns [ r_pre | z_pre | gx_n | gh_n ]
    w_gru = jnp.zeros((2 * H + 1, 4 * H), jnp.float32)
    w_gru = w_gru.at[0:H, 0:2 * H].set(w_ih[0:2 * H, :].T)
    w_gru = w_gru.at[0:H, 2 * H:3 * H].set(w_ih[2 * H:3 * H, :].T)
    w_gru = w_gru.at[H:2 * H, 0:2 * H].set(w_hh[0:2 * H, :].T)
    w_gru = w_gru.at[H:2 * H, 3 * H:4 * H].set(w_hh[2 * H:3 * H, :].T)
    w_gru = w_gru.at[2 * H, 0:2 * H].set(b_ih[0:2 * H] + b_hh[0:2 * H])
    w_gru = w_gru.at[2 * H, 2 * H:3 * H].set(b_ih[2 * H:3 * H])
    w_gru = w_gru.at[2 * H, 3 * H:4 * H].set(b_hh[2 * H:3 * H])

    Wa = params["attn_W"][0]           # (H, 2H)
    Wp = params["ptr_W"][0]            # (H, 2H)
    va = params["attn_v"].reshape(H)
    vp = params["ptr_v"].reshape(H)

    # Packed attention/pointer weights:  (2H, 2H+2)
    #   cols 0:H      rows 0:H  -> Wa_s      rows H:2H -> Wp_s
    #   cols H:2H     rows 0:H  -> Wa_h^T    rows H:2H -> Wp_h^T
    #   col  2H       rows 0:H  -> v_a       col 2H+1  rows 0:H -> v_p
    w_apv = jnp.zeros((2 * H, 2 * H + 2), jnp.float32)
    w_apv = w_apv.at[0:H, 0:H].set(Wa[:, 0:H])
    w_apv = w_apv.at[H:2 * H, 0:H].set(Wp[:, 0:H])
    w_apv = w_apv.at[0:H, H:2 * H].set(Wa[:, H:2 * H].T)
    w_apv = w_apv.at[H:2 * H, H:2 * H].set(Wp[:, H:2 * H].T)
    w_apv = w_apv.at[0:H, 2 * H].set(va)
    w_apv = w_apv.at[0:H, 2 * H + 1].set(vp)

    return {"w_gru": w_gru, "w_apv": w_apv}


# ---------------------------------------------------------------------------
# Wrapper: PyTorch layouts in, PyTorch layouts out (no per-call transposes).
# ---------------------------------------------------------------------------
def pointer_forward(prepped, static_hidden, decoder_hidden, last_hh):
    """static_hidden: (B, H, S), decoder_hidden: (B, H, 1), last_hh: (1, B, H)."""
    B, H, S = static_hidden.shape
    x = decoder_hidden.reshape(B, H)                 # free reshape
    h = last_hh.reshape(B, H)                        # free reshape

    flops = (2 * B * (2 * H) * (4 * H)               # GRU
             + 2 * B * (2 * H) * H * S               # static projections
             + 2 * 2 * B * H * H                     # h_proj + c_proj
             + 8 * B * H * S)                        # elementwise / reductions
    transcendentals = 2 * B * H + B * H + 2 * B * H * S + B * S
    bytes_accessed = 4 * (static_hidden.size + x.size + h.size
                          + prepped["w_gru"].size + prepped["w_apv"].size
                          + B * S + B * H)

    probs, hh_out = pl.pallas_call(
        _pointer_kernel,
        out_shape=(jax.ShapeDtypeStruct((B, S), jnp.float32),
                   jax.ShapeDtypeStruct((B, H), jnp.float32)),
        input_output_aliases={2: 1},                 # last_hh buffer -> new hidden
        cost_estimate=pl.CostEstimate(flops=flops,
                                      transcendentals=transcendentals,
                                      bytes_accessed=bytes_accessed),
    )(static_hidden, x, h, prepped["w_gru"], prepped["w_apv"])

    return probs, hh_out[None]                       # (B, S), (1, B, H)


# ---------------------------------------------------------------------------
# Pure-JAX reference (mirrors the PyTorch forward exactly) for verification.
# ---------------------------------------------------------------------------
def pointer_reference(params, static_hidden, decoder_hidden, last_hh):
    B, H, S = static_hidden.shape
    x = jnp.transpose(decoder_hidden, (0, 2, 1))[:, 0, :]     # (B, H)
    h = last_hh[0]                                            # (B, H)
    gx = x @ params["gru_w_ih"].T + params["gru_b_ih"]
    gh = h @ params["gru_w_hh"].T + params["gru_b_hh"]
    r = jax.nn.sigmoid(gx[:, :H] + gh[:, :H])
    z = jax.nn.sigmoid(gx[:, H:2 * H] + gh[:, H:2 * H])
    n = jnp.tanh(gx[:, 2 * H:] + r * gh[:, 2 * H:])
    rnn_out = (1.0 - z) * n + z * h                           # (B, H)

    hidden = jnp.concatenate(
        [static_hidden, jnp.broadcast_to(rnn_out[:, :, None], (B, H, S))], axis=1)
    Wa = jnp.broadcast_to(params["attn_W"], (B, H, 2 * H))
    va = jnp.broadcast_to(params["attn_v"], (B, 1, H))
    attns = jnp.einsum("bih,bhs->bis", va,
                       jnp.tanh(jnp.einsum("bhc,bcs->bhs", Wa, hidden)))
    attns = jax.nn.softmax(attns, axis=2)                     # (B, 1, S)

    context = jnp.einsum("bis,bsh->bih", attns,
                         jnp.transpose(static_hidden, (0, 2, 1)))   # (B, 1, H)
    context = jnp.broadcast_to(jnp.transpose(context, (0, 2, 1)), (B, H, S))
    energy = jnp.concatenate([static_hidden, context], axis=1)
    Wp = jnp.broadcast_to(params["ptr_W"], (B, H, 2 * H))
    vp = jnp.broadcast_to(params["ptr_v"], (B, 1, H))
    probs = jnp.einsum("bih,bhs->bis", vp,
                       jnp.tanh(jnp.einsum("bhc,bcs->bhs", Wp, energy)))[:, 0, :]
    return probs, rnn_out[None]


# ---------------------------------------------------------------------------
def init_params(key, hidden_size):
    H = hidden_size
    ks = jax.random.split(key, 8)
    scale = 0.1
    # The PyTorch module initializes v / W with zeros; use small random values so
    # the kernel path is numerically non-trivial.
    return {
        "ptr_v":    scale * jax.random.normal(ks[0], (1, 1, H), jnp.float32),
        "ptr_W":    scale * jax.random.normal(ks[1], (1, H, 2 * H), jnp.float32),
        "attn_v":   scale * jax.random.normal(ks[2], (1, 1, H), jnp.float32),
        "attn_W":   scale * jax.random.normal(ks[3], (1, H, 2 * H), jnp.float32),
        "gru_w_ih": scale * jax.random.normal(ks[4], (3 * H, H), jnp.float32),
        "gru_w_hh": scale * jax.random.normal(ks[5], (3 * H, H), jnp.float32),
        "gru_b_ih": scale * jax.random.normal(ks[6], (3 * H,), jnp.float32),
        "gru_b_hh": scale * jax.random.normal(ks[7], (3 * H,), jnp.float32),
    }


if __name__ == "__main__":
    B, H, S = 2, 32, 8   # batch, hidden_size, num_nodes (seq)

    key = jax.random.PRNGKey(0)
    k_p, k_s, k_d, k_h = jax.random.split(key, 4)
    params = init_params(k_p, H)

    static_hidden = jax.random.normal(k_s, (B, H, S), jnp.float32)
    decoder_hidden = jax.random.normal(k_d, (B, H, 1), jnp.float32)
    last_hh = jax.random.normal(k_h, (1, B, H), jnp.float32)

    prepped = prepare_params(params)          # one-time weight packing (hoisted)
    fwd = jax.jit(pointer_forward)
    probs, new_hh = fwd(prepped, static_hidden, decoder_hidden, last_hh)
    jax.block_until_ready((probs, new_hh))

    probs_ref, new_hh_ref = pointer_reference(params, static_hidden, decoder_hidden, last_hh)

    assert probs.shape == (B, S) and new_hh.shape == (1, B, H)
    assert jnp.allclose(new_hh, new_hh_ref, atol=1e-5, rtol=1e-5), \
        jnp.max(jnp.abs(new_hh - new_hh_ref))
    assert jnp.allclose(probs, probs_ref, atol=1e-4, rtol=1e-4), \
        jnp.max(jnp.abs(probs - probs_ref))

    print("KERNEL_OK")
</pallas_src>

<mosaic_0001>
module attributes {stable_mosaic.version = 11 : i64} {
  func.func @_pointer_kernel(%arg0: memref<2x32x8xf32, #tpu.memory_space<vmem>>, %arg1: memref<2x32xf32, #tpu.memory_space<vmem>>, %arg2: memref<2x32xf32, #tpu.memory_space<vmem>>, %arg3: memref<65x128xf32, #tpu.memory_space<vmem>>, %arg4: memref<64x66xf32, #tpu.memory_space<vmem>>, %arg5: memref<2x8xf32, #tpu.memory_space<vmem>>, %arg6: memref<2x32xf32, #tpu.memory_space<vmem>>) attributes {dimension_semantics = [], scalar_prefetch = 0 : i64, scratch_operands = 0 : i64, tpu.core_type = #tpu.core_type<tc>} {
    %c0 = arith.constant 0 : index
    %c0_0 = arith.constant 0 : index
    %0 = vector.load %arg1[%c0, %c0_0] : memref<2x32xf32, #tpu.memory_space<vmem>>, vector<2x32xf32>
    %c0_1 = arith.constant 0 : index
    %c0_2 = arith.constant 0 : index
    %1 = vector.load %arg2[%c0_1, %c0_2] : memref<2x32xf32, #tpu.memory_space<vmem>>, vector<2x32xf32>
    %c0_3 = arith.constant 0 : index
    %c0_4 = arith.constant 0 : index
    %2 = vector.load %arg3[%c0_3, %c0_4] : memref<65x128xf32, #tpu.memory_space<vmem>>, vector<65x128xf32>
    %3 = tpu.concatenate %0, %1 in 1 : vector<2x32xf32>, vector<2x32xf32> -> vector<2x64xf32>
    %4 = vector.extract_strided_slice %2 {offsets = [0, 0], sizes = [64, 128], strides = [1, 1]} : vector<65x128xf32> to vector<64x128xf32>
    %cst = arith.constant dense<0.000000e+00> : vector<2x128xf32>
    %5 = tpu.matmul %3, %4, %cst {dimension_numbers = #tpu.dot_dimension_numbers<[1], [0], [0], [1], [0, 0, 1, 1], [], []>} : vector<2x64xf32>, vector<64x128xf32>, vector<2x128xf32> -> vector<2x128xf32>
    %6 = vector.extract_strided_slice %2 {offsets = [64, 0], sizes = [1, 128], strides = [1, 1]} : vector<65x128xf32> to vector<1x128xf32>
    %7 = vector.broadcast %6 : vector<1x128xf32> to vector<2x128xf32>
    %8 = arith.addf %5, %7 : vector<2x128xf32>
    %9 = vector.extract_strided_slice %8 {offsets = [0, 0], sizes = [2, 32], strides = [1, 1]} : vector<2x128xf32> to vector<2x32xf32>
    %10 = arith.negf %9 : vector<2x32xf32>
    %11 = math.exp %10 : vector<2x32xf32>
    %cst_5 = arith.constant 1.000000e+00 : f32
    %12 = vector.broadcast %cst_5 : f32 to vector<2x32xf32>
    %13 = arith.addf %12, %11 : vector<2x32xf32>
    %14 = arith.divf %12, %13 : vector<2x32xf32>
    %15 = vector.extract_strided_slice %8 {offsets = [0, 32], sizes = [2, 32], strides = [1, 1]} : vector<2x128xf32> to vector<2x32xf32>
    %16 = arith.negf %15 : vector<2x32xf32>
    %17 = math.exp %16 : vector<2x32xf32>
    %cst_6 = arith.constant 1.000000e+00 : f32
    %18 = vector.broadcast %cst_6 : f32 to vector<2x32xf32>
    %19 = arith.addf %18, %17 : vector<2x32xf32>
    %20 = arith.divf %18, %19 : vector<2x32xf32>
    %21 = vector.extract_strided_slice %8 {offsets = [0, 64], sizes = [2, 32], strides = [1, 1]} : vector<2x128xf32> to vector<2x32xf32>
    %22 = vector.extract_strided_slice %8 {offsets = [0, 96], sizes = [2, 32], strides = [1, 1]} : vector<2x128xf32> to vector<2x32xf32>
    %23 = arith.mulf %14, %22 : vector<2x32xf32>
    %24 = arith.addf %21, %23 : vector<2x32xf32>
    %25 = math.tanh %24 : vector<2x32xf32>
    %cst_7 = arith.constant 1.000000e+00 : f32
    %26 = vector.broadcast %cst_7 : f32 to vector<2x32xf32>
    %27 = arith.subf %26, %20 : vector<2x32xf32>
    %28 = arith.mulf %27, %25 : vector<2x32xf32>
    %29 = arith.mulf %20, %1 : vector<2x32xf32>
    %30 = arith.addf %28, %29 : vector<2x32xf32>
    %c0_8 = arith.constant 0 : index
    %c0_9 = arith.constant 0 : index
    %31 = vector.load %arg6[%c0_8, %c0_9] : memref<2x32xf32, #tpu.memory_space<vmem>>, vector<2x32xf32>
    tpu.vector_store %arg6[%c0_8, %c0_9], %30 {strides = array<i32>} : memref<2x32xf32, #tpu.memory_space<vmem>>, vector<2x32xf32>,
    %c0_10 = arith.constant 0 : index
    %c0_11 = arith.constant 0 : index
    %c0_12 = arith.constant 0 : index
    %32 = vector.load %arg0[%c0_10, %c0_11, %c0_12] : memref<2x32x8xf32, #tpu.memory_space<vmem>>, vector<2x32x8xf32>
    %c0_13 = arith.constant 0 : index
    %c0_14 = arith.constant 0 : index
    %33 = vector.load %arg4[%c0_13, %c0_14] : memref<64x66xf32, #tpu.memory_space<vmem>>, vector<64x66xf32>
    %34 = vector.extract_strided_slice %33 {offsets = [0, 0], sizes = [64, 32], strides = [1, 1]} : vector<64x66xf32> to vector<64x32xf32>
    %35 = vector.extract_strided_slice %33 {offsets = [0, 32], sizes = [32, 32], strides = [1, 1]} : vector<64x66xf32> to vector<32x32xf32>
    %36 = vector.extract_strided_slice %33 {offsets = [32, 32], sizes = [32, 32], strides = [1, 1]} : vector<64x66xf32> to vector<32x32xf32>
    %37 = vector.extract_strided_slice %33 {offsets = [0, 64], sizes = [32, 1], strides = [1, 1]} : vector<64x66xf32> to vector<32x1xf32>
    %38 = vector.extract_strided_slice %33 {offsets = [0, 65], sizes = [32, 1], strides = [1, 1]} : vector<64x66xf32> to vector<32x1xf32>
    %39 = vector.shape_cast %34 : vector<64x32xf32> to vector<1x64x32xf32>
    %40 = vector.shape_cast %39 : vector<1x64x32xf32> to vector<1x64x32xf32>
    %41 = vector.broadcast %40 : vector<1x64x32xf32> to vector<2x64x32xf32>
    %cst_15 = arith.constant dense<0.000000e+00> : vector<2x64x8xf32>
    %42 = tpu.matmul %41, %32, %cst_15 {dimension_numbers = #tpu.dot_dimension_numbers<[2], [1], [1], [2], [0, 0, 0, 1, 1, 2], [0], [0]>} : vector<2x64x32xf32>, vector<2x32x8xf32>, vector<2x64x8xf32> -> vector<2x64x8xf32>
    %43 = vector.extract_strided_slice %42 {offsets = [0, 0, 0], sizes = [2, 32, 8], strides = [1, 1, 1]} : vector<2x64x8xf32> to vector<2x32x8xf32>
    %44 = vector.extract_strided_slice %42 {offsets = [0, 32, 0], sizes = [2, 32, 8], strides = [1, 1, 1]} : vector<2x64x8xf32> to vector<2x32x8xf32>
    %cst_16 = arith.constant dense<0.000000e+00> : vector<2x32xf32>
    %45 = tpu.matmul %30, %35, %cst_16 {dimension_numbers = #tpu.dot_dimension_numbers<[1], [0], [0], [1], [0, 0, 1, 1], [], []>} : vector<2x32xf32>, vector<32x32xf32>, vector<2x32xf32> -> vector<2x32xf32>
    %46 = vector.shape_cast %45 : vector<2x32xf32> to vector<2x32x1xf32>
    %47 = vector.broadcast %46 : vector<2x32x1xf32> to vector<2x32x8xf32>
    %48 = arith.addf %43, %47 : vector<2x32x8xf32>
    %49 = math.tanh %48 : vector<2x32x8xf32>
    %50 = vector.shape_cast %37 : vector<32x1xf32> to vector<1x32x1xf32>
    %51 = vector.broadcast %50 : vector<1x32x1xf32> to vector<2x32x8xf32>
    %52 = arith.mulf %49, %51 : vector<2x32x8xf32>
    %cst_17 = arith.constant dense<0.000000e+00> : vector<2x8xf32>
    %53 = vector.multi_reduction <add>, %52, %cst_17 [1] : vector<2x32x8xf32> to vector<2x8xf32>
    %cst_18 = arith.constant dense<0xFF800000> : vector<2xf32>
    %54 = vector.multi_reduction <maximumf>, %53, %cst_18 [1] : vector<2x8xf32> to vector<2xf32>
    %55 = vector.shape_cast %54 : vector<2xf32> to vector<2x1xf32>
    %56 = vector.broadcast %55 : vector<2x1xf32> to vector<2x8xf32>
    %57 = arith.subf %53, %56 : vector<2x8xf32>
    %58 = math.exp %57 : vector<2x8xf32>
    %cst_19 = arith.constant dense<0.000000e+00> : vector<2xf32>
    %59 = vector.multi_reduction <add>, %58, %cst_19 [1] : vector<2x8xf32> to vector<2xf32>
    %60 = vector.shape_cast %59 : vector<2xf32> to vector<2x1xf32>
    %61 = vector.broadcast %60 : vector<2x1xf32> to vector<2x8xf32>
    %62 = arith.divf %58, %61 : vector<2x8xf32>
    %63 = vector.shape_cast %62 : vector<2x8xf32> to vector<2x1x8xf32>
    %64 = vector.broadcast %63 : vector<2x1x8xf32> to vector<2x32x8xf32>
    %65 = arith.mulf %64, %32 : vector<2x32x8xf32>
    %cst_20 = arith.constant dense<0.000000e+00> : vector<2x32xf32>
    %66 = vector.multi_reduction <add>, %65, %cst_20 [2] : vector<2x32x8xf32> to vector<2x32xf32>
    %cst_21 = arith.constant dense<0.000000e+00> : vector<2x32xf32>
    %67 = tpu.matmul %66, %36, %cst_21 {dimension_numbers = #tpu.dot_dimension_numbers<[1], [0], [0], [1], [0, 0, 1, 1], [], []>} : vector<2x32xf32>, vector<32x32xf32>, vector<2x32xf32> -> vector<2x32xf32>
    %68 = vector.shape_cast %67 : vector<2x32xf32> to vector<2x32x1xf32>
    %69 = vector.broadcast %68 : vector<2x32x1xf32> to vector<2x32x8xf32>
    %70 = arith.addf %44, %69 : vector<2x32x8xf32>
    %71 = math.tanh %70 : vector<2x32x8xf32>
    %72 = vector.shape_cast %38 : vector<32x1xf32> to vector<1x32x1xf32>
    %73 = vector.broadcast %72 : vector<1x32x1xf32> to vector<2x32x8xf32>
    %74 = arith.mulf %71, %73 : vector<2x32x8xf32>
    %cst_22 = arith.constant dense<0.000000e+00> : vector<2x8xf32>
    %75 = vector.multi_reduction <add>, %74, %cst_22 [1] : vector<2x32x8xf32> to vector<2x8xf32>
    %c0_23 = arith.constant 0 : index
    %c0_24 = arith.constant 0 : index
    %76 = vector.load %arg5[%c0_23, %c0_24] : memref<2x8xf32, #tpu.memory_space<vmem>>, vector<2x8xf32>
    tpu.vector_store %arg5[%c0_23, %c0_24], %75 {strides = array<i32>} : memref<2x8xf32, #tpu.memory_space<vmem>>, vector<2x8xf32>,
    return
  }
}

</mosaic_0001>

<llo_original>
// kernel: pointer_forward.1
$region0: #{pointer_forward.1}
  #allocation0 [shape = 'u32[]', space=smem, size = 0x4, offset = 0x4, fixed_abs, tag = 'smem constant byte address 0x4 - core index']
  #allocation1 [shape = 'u32[72,128]{1,0:T(1,128)}', space=vmem, size = 0x9000, scoped, tag = 'internal scratch']
  %s0 = inlined_call_operand.vmem [shape: f32[2,32,8], index: 0, kind: input, shape index: {}]
  %s1 = inlined_call_operand.vmem [shape: f32[2,32], index: 1, kind: input, shape index: {}]
  %s2 = inlined_call_operand.vmem [shape: f32[2,32], index: 2, kind: input, shape index: {}, may-alias: {2,6}]
  %s3 = inlined_call_operand.vmem [shape: f32[65,128], index: 3, kind: input, shape index: {}]
  %s4 = inlined_call_operand.hbm [shape: f32[64,66], index: 4, kind: input, shape index: {}]
  %s5 = inlined_call_operand.hbm [shape: f32[2,8], index: 5, kind: output, shape index: {0}]
  %s6 = inlined_call_operand.vmem [shape: f32[2,32], index: 6, kind: output, shape index: {1}, may-alias: {2,6}]
  %7 = xla_tuple %s5, %s6
  %s8 = sld [smem:[#allocation0]]
  $region42: #{pointer_forward.1} parent=0
    _
  %s10 = ssub.s32 1, %s8
  %s11 = scalar_select 0, %s10, %s8
  $region1: #{pointer_forward.1} parent=0
    #allocation2 [shape = 'u8[32768]{0}', space=vmem, size = 0x8000, scoped, tag = 'input window, operand 4, single buffered']
    #allocation3 [shape = 's32[1]{0}', space=sflag, size = 0x4, scoped, tag = 'scoped memory for pointer_forward.1']
    #allocation4 [shape = 's32[1]{0}', space=sflag, size = 0x4, scoped, tag = 'scoped memory for pointer_forward.1']
    #allocation5 [shape = 'u8[1024]{0}', space=vmem, size = 0x400, scoped, tag = 'output window, operand 0, single buffered']
    %12 = vsyncpa [#allocation3], 0
    %13 = vsyncpa [#allocation4], 0
    // Predicated region
    $region2: #{pointer_forward.1} parent=1 // pred_check
      _
    $region3: #{pointer_forward.1} parent=1 // pred_check_branch
      %15 = sbr.rel (0) target = $region5
    $region4: #{pointer_forward.1} parent=1 // pred_region
      _
    $region5: #{pointer_forward.1} parent=1 // pred_fallthru
      _
    // Predicated region
    $region6: #{pointer_forward.1} parent=1 // pred_check
      _
    $region7: #{pointer_forward.1} parent=1 // pred_check_branch
      %17 = sbr.rel (0) target = $region9
    $region8: #{pointer_forward.1} parent=1 // pred_region
      _
    $region9: #{pointer_forward.1} parent=1 // pred_fallthru
      _
    // Predicated region
    $region10: #{pointer_forward.1} parent=1 // pred_check
      _
    $region11: #{pointer_forward.1} parent=1 // pred_check_branch
      %19 = sbr.rel (0) target = $region13
    $region12: #{pointer_forward.1} parent=1 // pred_region
      _
    $region13: #{pointer_forward.1} parent=1 // pred_fallthru
      _
    // Predicated region
    $region14: #{pointer_forward.1} parent=1 // pred_check
      _
    $region15: #{pointer_forward.1} parent=1 // pred_check_branch
      %21 = sbr.rel (0) target = $region17
    $region16: #{pointer_forward.1} parent=1 // pred_region
      _
    $region17: #{pointer_forward.1} parent=1 // pred_fallthru
      _
    // Predicated region
    $region18: #{pointer_forward.1} parent=1 // pred_check
      _
    $region19: #{pointer_forward.1} parent=1 // pred_check_branch
      %23 = sbr.rel (0) target = $region21
    $region20: #{pointer_forward.1} parent=1 // pred_region
      %25 = vsyncadd [#allocation3], 0
      %s26 = sshll.u32 %s4, 4
      %s27 = int_to_ptr.hbm [resolvable:$true] %s26
      %s28 = sshll.u32 [#allocation2], 4
      %s29 = int_to_ptr.vmem [resolvable:$true] %s28
      %34 = dma.hbm_to_vmem [thread:$0]  %s27, 1024, %s29, [#allocation3], 128, 128, 8
    $region21: #{pointer_forward.1} parent=1 // pred_fallthru
      _
    // Predicated region
    $region22: #{pointer_forward.1} parent=1 // pred_check
      _
    $region23: #{pointer_forward.1} parent=1 // pred_check_branch
      %36 = sbr.rel (0) target = $region25
    $region24: #{pointer_forward.1} parent=1 // pred_region
      %38 = dma.done [#allocation3], 1024
    $region25: #{pointer_forward.1} parent=1 // pred_fallthru
      _
    %v39 = vld [vmem:[%s1] sm:$0x3]
    %v40 = vld [vmem:[%s2] sm:$0x3]
    %v41 = vld [vmem:[%s3] sm:$0xff]
    %v42 = vld [vmem:[%s3 + $0x8] sm:$0xff]
    %v43 = vld [vmem:[%s3 + $0x10] sm:$0xff]
    %v44 = vld [vmem:[%s3 + $0x18] sm:$0xff]
    %v45 = vld [vmem:[%s3 + $0x20] sm:$0xff]
    %v46 = vld [vmem:[%s3 + $0x28] sm:$0xff]
    %v47 = vld [vmem:[%s3 + $0x30] sm:$0xff]
    %v48 = vld [vmem:[%s3 + $0x38] sm:$0xff]
    %v49 = vld [vmem:[%s3 + $0x40] sm:$0x1]
    %51 = vrot.lane.b32.xlu0 %v40, 32
    %v52 = vpop.permute.xlu0 %51
    %vm54 = vcmask 261120
    %v55 = vsel %vm54, %v39, %v52
    %v56 = vperm.slane %v49, 0
    %vm57 = vcmask 523264
    %v59 = vsel %vm57, %v55, 0
    %61 = vmatpush.msra.mxu0 0.0
    %62 = vmatpush.msra.mxu0 0.0
    %63 = vmatpush.msra.mxu0 0.0
    %64 = vmatpush.msra.mxu0 0.0
    %65 = vmatpush.msra.mxu0 0.0
    %66 = vmatpush.msra.mxu0 0.0
    %67 = vmatpush.msra.mxu0 0.0
    %68 = vmatpush.msra.mxu0 0.0
    %69 = vmatpush.msra.mxu0 %v48
    %70 = vmatpush.msra.mxu0 %v47
    %71 = vmatpush.msra.mxu0 %v46
    %72 = vmatpush.msra.mxu0 %v45
    %73 = vmatpush.msra.mxu0 %v44
    %74 = vmatpush.msra.mxu0 %v43
    %75 = vmatpush.msra.mxu0 %v42
    %76 = vmatpush.msra.mxu0 %v41
    %77 = vmatmul.f32.gmra.mxu0 %v59
    %v78 = vpop.f32.mrf.mxu0
    %v79 = vadd.f32 %v56, %v78
    %80 = vdwg.mxu0
    %v81 = vxor.u32 %v79, 2147483648
    %v82 = vmul.f32 %v81, 1.442695
    %v83 = vpow.pop %v82
    %v84 = vadd.f32 %v83, 1.0
    %v85 = vrcp.pop %v84
    %v86 = vmul.f32 %v84, %v85
    %v87 = vsub.f32 1.0, %v86
    %v88 = vmul.f32 %v85, %v87
    %v89 = vadd.f32 %v85, %v88
    %vm90 = vweird.f32 %v84
    %vm91 = vweird.f32 %v85
    %vm92 = vmor %vm90, %vm91
    %v93 = vsel %vm92, %v85, %v89
    %v94 = vand.u32 2147483647, %v84
    %vm95 = vcmp.eq.f32.partialorder %v94, 8.507059e+37
    %v96 = vand.u32 %v84, 2147483648
    %v97 = vor.u32 1.1754944e-38, %v96
    %v98 = vsel %vm95, %v97, %v93
    %v99 = vmul.f32 1.0, %v98
    %101 = vrot.lane.b32.xlu0 %v79, 32
    %v102 = vpop.permute.xlu0 %101
    %v104 = vmul.f32 %v99, %v102
    %106 = vrot.lane.b32.xlu0 %v104, 64
    %v107 = vpop.permute.xlu0 %106
    %v109 = vadd.f32 %v79, %v107
    %v110 = vtanh.pop %v109
    %v111 = vsub.f32 1.0, %v99
    %113 = vrot.lane.b32.xlu0 %v110, 96
    %v114 = vpop.permute.xlu0 %113
    %v116 = vmul.f32 %v111, %v114
    %v117 = vmul.f32 %v99, %v52
    %v118 = vadd.f32 %v116, %v117
    %120 = vrot.lane.b32.xlu0 %v118, 96
    %v121 = vpop.permute.xlu0 %120
    %vm123 = vcmask 254976
    %124 = vst.msk [vmem:[%s6] sm:$0x3] %vm123, %v121
    %v125 = vld [vmem:[%s0] sm:$0xff]
    %v126 = vld [vmem:[%s0 + $0x8] sm:$0xff]
    %v127 = vld [vmem:[%s0 + $0x10] sm:$0xff]
    %v128 = vld [vmem:[%s0 + $0x18] sm:$0xff]
    %v129 = vld [vmem:[%s0 + $0x20] sm:$0xff]
    %v130 = vld [vmem:[%s0 + $0x28] sm:$0xff]
    %v131 = vld [vmem:[%s0 + $0x30] sm:$0xff]
    %v132 = vld [vmem:[%s0 + $0x38] sm:$0xff]
    %v133 = vld [vmem:[#allocation2] sm:$0xff]
    %v134 = vld [vmem:[#allocation2 + $0x8] sm:$0xff]
    %v135 = vld [vmem:[#allocation2 + $0x10] sm:$0xff]
    %v136 = vld [vmem:[#allocation2 + $0x18] sm:$0xff]
    %v137 = vld [vmem:[#allocation2 + $0x20] sm:$0xff]
    %v138 = vld [vmem:[#allocation2 + $0x28] sm:$0xff]
    %v139 = vld [vmem:[#allocation2 + $0x30] sm:$0xff]
    %v140 = vld [vmem:[#allocation2 + $0x38] sm:$0xff]
    %v142 = vsel %vm54, %v133, 0
    %v145 = vsel %vm54, %v134, 0
    %v148 = vsel %vm54, %v135, 0
    %v151 = vsel %vm54, %v136, 0
    %v154 = vsel %vm54, %v137, 0
    %v157 = vsel %vm54, %v138, 0
    %v160 = vsel %vm54, %v139, 0
    %v163 = vsel %vm54, %v140, 0
    %165 = vmatpush.msra.mxu0 0.0
    %166 = vmatpush.msra.mxu0 0.0
    %167 = vmatpush.msra.mxu0 0.0
    %168 = vmatpush.msra.mxu0 0.0
    %169 = vmatpush.msra.mxu0 0.0
    %170 = vmatpush.msra.mxu0 0.0
    %171 = vmatpush.msra.mxu0 0.0
    %172 = vmatpush.msra.mxu0 0.0
    %173 = vmatpush.msra.mxu0 0.0
    %174 = vmatpush.msra.mxu0 0.0
    %175 = vmatpush.msra.mxu0 0.0
    %176 = vmatpush.msra.mxu0 0.0
    %177 = vmatpush.msra.mxu0 %v128
    %178 = vmatpush.msra.mxu0 %v127
    %179 = vmatpush.msra.mxu0 %v126
    %180 = vmatpush.msra.mxu0 %v125
    %181 = vmatmul.f32.gmra.mxu0 %v142
    %v182 = vpop.f32.mrf.mxu0
    %v183 = vadd.f32 0.0, %v182
    %184 = vmatmul.f32.gmra.mxu0 %v145
    %v185 = vpop.f32.mrf.mxu0
    %v186 = vadd.f32 0.0, %v185
    %187 = vmatmul.f32.gmra.mxu0 %v148
    %v188 = vpop.f32.mrf.mxu0
    %v189 = vadd.f32 0.0, %v188
    %190 = vmatmul.f32.gmra.mxu0 %v151
    %v191 = vpop.f32.mrf.mxu0
    %v192 = vadd.f32 0.0, %v191
    %193 = vmatmul.f32.gmra.mxu0 %v154
    %v194 = vpop.f32.mrf.mxu0
    %v195 = vadd.f32 0.0, %v194
    %196 = vmatmul.f32.gmra.mxu0 %v157
    %v197 = vpop.f32.mrf.mxu0
    %v198 = vadd.f32 0.0, %v197
    %199 = vmatmul.f32.gmra.mxu0 %v160
    %v200 = vpop.f32.mrf.mxu0
    %v201 = vadd.f32 0.0, %v200
    %202 = vmatmul.f32.gmra.mxu0 %v163
    %v203 = vpop.f32.mrf.mxu0
    %v204 = vadd.f32 0.0, %v203
    %205 = vdwg.mxu0
    %206 = vmatpush.msra.mxu0 0.0
    %207 = vmatpush.msra.mxu0 0.0
    %208 = vmatpush.msra.mxu0 0.0
    %209 = vmatpush.msra.mxu0 0.0
    %210 = vmatpush.msra.mxu0 0.0
    %211 = vmatpush.msra.mxu0 0.0
    %212 = vmatpush.msra.mxu0 0.0
    %213 = vmatpush.msra.mxu0 0.0
    %214 = vmatpush.msra.mxu0 0.0
    %215 = vmatpush.msra.mxu0 0.0
    %216 = vmatpush.msra.mxu0 0.0
    %217 = vmatpush.msra.mxu0 0.0
    %218 = vmatpush.msra.mxu0 %v132
    %219 = vmatpush.msra.mxu0 %v131
    %220 = vmatpush.msra.mxu0 %v130
    %221 = vmatpush.msra.mxu0 %v129
    %222 = vmatmul.f32.gmra.mxu0 %v142
    %v223 = vpop.f32.mrf.mxu0
    %v224 = vadd.f32 0.0, %v223
    %225 = vmatmul.f32.gmra.mxu0 %v145
    %v226 = vpop.f32.mrf.mxu0
    %v227 = vadd.f32 0.0, %v226
    %228 = vmatmul.f32.gmra.mxu0 %v148
    %v229 = vpop.f32.mrf.mxu0
    %v230 = vadd.f32 0.0, %v229
    %231 = vmatmul.f32.gmra.mxu0 %v151
    %v232 = vpop.f32.mrf.mxu0
    %v233 = vadd.f32 0.0, %v232
    %234 = vmatmul.f32.gmra.mxu0 %v154
    %v235 = vpop.f32.mrf.mxu0
    %v236 = vadd.f32 0.0, %v235
    %237 = vmatmul.f32.gmra.mxu0 %v157
    %v238 = vpop.f32.mrf.mxu0
    %v239 = vadd.f32 0.0, %v238
    %240 = vmatmul.f32.gmra.mxu0 %v160
    %v241 = vpop.f32.mrf.mxu0
    %v242 = vadd.f32 0.0, %v241
    %243 = vmatmul.f32.gmra.mxu0 %v163
    %v244 = vpop.f32.mrf.mxu0
    %v245 = vadd.f32 0.0, %v244
    %246 = vdwg.mxu0
    %247 = vrot.lane.b32.xlu0 %v133, 96
    %v248 = vpop.permute.xlu0 %247
    %249 = vrot.lane.b32.xlu0 %v134, 96
    %v250 = vpop.permute.xlu0 %249
    %251 = vrot.lane.b32.xlu0 %v135, 96
    %v252 = vpop.permute.xlu0 %251
    %253 = vrot.lane.b32.xlu0 %v136, 96
    %v254 = vpop.permute.xlu0 %253
    %v259 = vsel %vm54, %v121, 0
    %261 = vmatpush.msra.mxu0 0.0
    %262 = vmatpush.msra.mxu0 0.0
    %263 = vmatpush.msra.mxu0 0.0
    %264 = vmatpush.msra.mxu0 0.0
    %265 = vmatpush.msra.mxu0 0.0
    %266 = vmatpush.msra.mxu0 0.0
    %267 = vmatpush.msra.mxu0 0.0
    %268 = vmatpush.msra.mxu0 0.0
    %269 = vmatpush.msra.mxu0 0.0
    %270 = vmatpush.msra.mxu0 0.0
    %271 = vmatpush.msra.mxu0 0.0
    %272 = vmatpush.msra.mxu0 0.0
    %273 = vmatpush.msra.mxu0 %v254
    %274 = vmatpush.msra.mxu0 %v252
    %275 = vmatpush.msra.mxu0 %v250
    %276 = vmatpush.msra.mxu0 %v248
    %277 = vmatmul.f32.gmra.mxu0 %v259
    %v278 = vpop.f32.mrf.mxu0
    %v279 = vadd.f32 0.0, %v278
    %280 = vdwg.mxu0
    %v281 = vperm.slane %v279, 0
    %v282 = vlaneseq
    %v283 = vshrl.u32 %v282, 7
    %285 = vset.pattern.permute.xlu0 %v283
    %286 = vperm.xlu0 %285, %v281
    %v287 = vpop.permute.xlu0 %286
    %v288 = vlaneseq
    %v289 = vshrl.u32 %v288, 7
    %v290 = vadd.s32 %v289, 8
    %291 = vset.pattern.permute.xlu0 %v290
    %292 = vperm.xlu0 %291, %v281
    %v293 = vpop.permute.xlu0 %292
    %v294 = vlaneseq
    %v295 = vshrl.u32 %v294, 7
    %v296 = vadd.s32 %v295, 16
    %297 = vset.pattern.permute.xlu0 %v296
    %298 = vperm.xlu0 %297, %v281
    %v299 = vpop.permute.xlu0 %298
    %v300 = vlaneseq
    %v301 = vshrl.u32 %v300, 7
    %v302 = vadd.s32 %v301, 24
    %303 = vset.pattern.permute.xlu0 %v302
    %304 = vperm.xlu0 %303, %v281
    %v305 = vpop.permute.xlu0 %304
    %v306 = vperm.slane %v279, 1
    %v307 = vlaneseq
    %v308 = vshrl.u32 %v307, 7
    %310 = vset.pattern.permute.xlu0 %v308
    %311 = vperm.xlu0 %310, %v306
    %v312 = vpop.permute.xlu0 %311
    %v313 = vlaneseq
    %v314 = vshrl.u32 %v313, 7
    %v315 = vadd.s32 %v314, 8
    %316 = vset.pattern.permute.xlu0 %v315
    %317 = vperm.xlu0 %316, %v306
    %v318 = vpop.permute.xlu0 %317
    %v319 = vlaneseq
    %v320 = vshrl.u32 %v319, 7
    %v321 = vadd.s32 %v320, 16
    %322 = vset.pattern.permute.xlu0 %v321
    %323 = vperm.xlu0 %322, %v306
    %v324 = vpop.permute.xlu0 %323
    %v325 = vlaneseq
    %v326 = vshrl.u32 %v325, 7
    %v327 = vadd.s32 %v326, 24
    %328 = vset.pattern.permute.xlu0 %v327
    %329 = vperm.xlu0 %328, %v306
    %v330 = vpop.permute.xlu0 %329
    %v331 = vadd.f32 %v183, %v287
    %v332 = vadd.f32 %v186, %v293
    %v333 = vadd.f32 %v189, %v299
    %v334 = vadd.f32 %v192, %v305
    %v335 = vadd.f32 %v224, %v312
    %v336 = vadd.f32 %v227, %v318
    %v337 = vadd.f32 %v230, %v324
    %v338 = vadd.f32 %v233, %v330
    %v339 = vtanh.pop %v331
    %v340 = vtanh.pop %v332
    %v341 = vtanh.pop %v333
    %v342 = vtanh.pop %v334
    %v343 = vtanh.pop %v335
    %v344 = vtanh.pop %v336
    %v345 = vtanh.pop %v337
    %v346 = vtanh.pop %v338
    %347 = vset.pattern.permute.xlu0 64
    %348 = vperm.xlu0 %347, %v133
    %v349 = vpop.permute.xlu0 %348
    %351 = vset.pattern.permute.xlu0 64
    %352 = vperm.xlu0 %351, %v134
    %v353 = vpop.permute.xlu0 %352
    %355 = vset.pattern.permute.xlu0 64
    %356 = vperm.xlu0 %355, %v135
    %v357 = vpop.permute.xlu0 %356
    %359 = vset.pattern.permute.xlu0 64
    %360 = vperm.xlu0 %359, %v136
    %v361 = vpop.permute.xlu0 %360
    %v363 = vmul.f32 %v339, %v349
    %v364 = vmul.f32 %v340, %v353
    %v365 = vmul.f32 %v341, %v357
    %v366 = vmul.f32 %v342, %v361
    %v367 = vmul.f32 %v343, %v349
    %v368 = vmul.f32 %v344, %v353
    %v369 = vmul.f32 %v345, %v357
    %v370 = vmul.f32 %v346, %v361
    %vm371 = vcmask 64512
    %v372 = vsel %vm371, %v363, 0.0
    %v373 = vsel %vm371, %v364, 0.0
    %v374 = vadd.f32 %v372, %v373
    %v375 = vsel %vm371, %v365, 0.0
    %v376 = vadd.f32 %v374, %v375
    %v377 = vsel %vm371, %v366, 0.0
    %v378 = vadd.f32 %v376, %v377
    %v379 = vrot.slane %v378, 4
    %v380 = vadd.f32 %v378, %v379
    %v381 = vrot.slane %v380, 2
    %v382 = vadd.f32 %v380, %v381
    %v383 = vrot.slane %v382, 1
    %v384 = vadd.f32 %v382, %v383
    %v385 = vsel %vm371, %v367, 0.0
    %v386 = vsel %vm371, %v368, 0.0
    %v387 = vadd.f32 %v385, %v386
    %v388 = vsel %vm371, %v369, 0.0
    %v389 = vadd.f32 %v387, %v388
    %v390 = vsel %vm371, %v370, 0.0
    %v391 = vadd.f32 %v389, %v390
    %v392 = vrot.slane %v391, 4
    %v393 = vadd.f32 %v391, %v392
    %v394 = vrot.slane %v393, 2
    %v395 = vadd.f32 %v393, %v394
    %v396 = vrot.slane %v395, 1
    %v397 = vadd.f32 %v395, %v396
    %vm400 = vcmask 1041409
    %v401 = vsel %vm400, %v397, %v384
    %vm403 = vcmask 58368
    %v404 = vsel %vm403, %v401, -inf
    %405 = vmax.xlane.f32.xlu0 %v404
    %v406 = vpop.xlane.xlu0 %405
    %v408 = vrot.slane %v406, 1
    %v411 = vsub.f32 %v384, %v406
    %v412 = vsub.f32 %v397, %v408
    %v413 = vmul.f32 %v411, 1.442695
    %v414 = vpow.pop %v413
    %v415 = vmul.f32 %v412, 1.442695
    %v416 = vpow.pop %v415
    %v419 = vrot.slane %v416, 7
    %v420 = vsel %vm400, %v419, %v414
    %v422 = vsel %vm403, %v420, 0.0
    %423 = vadd.xlane.f32.xlu0 %v422
    %v424 = vpop.xlane.xlu0 %423
    %v426 = vrot.slane %v424, 1
    %v429 = vrcp.pop %v424
    %v430 = vmul.f32 %v424, %v429
    %v431 = vsub.f32 1.0, %v430
    %v432 = vmul.f32 %v429, %v431
    %v433 = vadd.f32 %v429, %v432
    %vm434 = vweird.f32 %v424
    %vm435 = vweird.f32 %v429
    %vm436 = vmor %vm434, %vm435
    %v437 = vsel %vm436, %v429, %v433
    %v438 = vand.u32 2147483647, %v424
    %vm439 = vcmp.eq.f32.partialorder %v438, 8.507059e+37
    %v440 = vand.u32 %v424, 2147483648
    %v441 = vor.u32 1.1754944e-38, %v440
    %v442 = vsel %vm439, %v441, %v437
    %v443 = vmul.f32 %v414, %v442
    %v444 = vrcp.pop %v426
    %v445 = vmul.f32 %v426, %v444
    %v446 = vsub.f32 1.0, %v445
    %v447 = vmul.f32 %v444, %v446
    %v448 = vadd.f32 %v444, %v447
    %vm449 = vweird.f32 %v426
    %vm450 = vweird.f32 %v444
    %vm451 = vmor %vm449, %vm450
    %v452 = vsel %vm451, %v444, %v448
    %v453 = vand.u32 2147483647, %v426
    %vm454 = vcmp.eq.f32.partialorder %v453, 8.507059e+37
    %v455 = vand.u32 %v426, 2147483648
    %v456 = vor.u32 1.1754944e-38, %v455
    %v457 = vsel %vm454, %v456, %v452
    %v458 = vmul.f32 %v416, %v457
    %v459 = vperm.slane %v443, 0
    %v460 = vperm.slane %v458, 0
    %v461 = vmul.f32 %v459, %v125
    %v462 = vmul.f32 %v459, %v126
    %v463 = vmul.f32 %v459, %v127
    %v464 = vmul.f32 %v459, %v128
    %v465 = vmul.f32 %v460, %v129
    %v466 = vmul.f32 %v460, %v130
    %v467 = vmul.f32 %v460, %v131
    %v468 = vmul.f32 %v460, %v132
    %v469 = vsel %vm371, %v461, 0.0
    %470 = vadd.xlane.f32.xlu0 %v469
    %v471 = vpop.xlane.xlu0 %470
    %v472 = vsel %vm371, %v462, 0.0
    %473 = vadd.xlane.f32.xlu0 %v472
    %v474 = vpop.xlane.xlu0 %473
    %v475 = vsel %vm371, %v463, 0.0
    %476 = vadd.xlane.f32.xlu0 %v475
    %v477 = vpop.xlane.xlu0 %476
    %v478 = vsel %vm371, %v464, 0.0
    %479 = vadd.xlane.f32.xlu0 %v478
    %v480 = vpop.xlane.xlu0 %479
    %v481 = vsel %vm371, %v465, 0.0
    %482 = vadd.xlane.f32.xlu0 %v481
    %v483 = vpop.xlane.xlu0 %482
    %v484 = vsel %vm371, %v466, 0.0
    %485 = vadd.xlane.f32.xlu0 %v484
    %v486 = vpop.xlane.xlu0 %485
    %v487 = vsel %vm371, %v467, 0.0
    %488 = vadd.xlane.f32.xlu0 %v487
    %v489 = vpop.xlane.xlu0 %488
    %v490 = vsel %vm371, %v468, 0.0
    %491 = vadd.xlane.f32.xlu0 %v490
    %v492 = vpop.xlane.xlu0 %491
    %v501 = vlaneseq
    %v502 = vand.u32 %v501, 127
    %v503 = vperm.slane %v471, %v502
    %v504 = vadd.s32 %v502, 4294967288
    %v505 = vperm.slane %v474, %v504
    %vm506 = vcmask 130112
    %v507 = vsel %vm506, %v505, %v503
    %v508 = vadd.s32 %v502, 4294967280
    %v509 = vperm.slane %v477, %v508
    %vm510 = vcmask 195712
    %v511 = vsel %vm510, %v509, %v507
    %v512 = vadd.s32 %v502, 4294967272
    %v513 = vperm.slane %v480, %v512
    %vm514 = vcmask 261312
    %v515 = vsel %vm514, %v513, %v511
    %v516 = vperm.slane %v483, %v502
    %v517 = vperm.slane %v486, %v504
    %v518 = vsel %vm506, %v517, %v516
    %v519 = vperm.slane %v489, %v508
    %v520 = vsel %vm510, %v519, %v518
    %v521 = vperm.slane %v492, %v512
    %v522 = vsel %vm514, %v521, %v520
    %v523 = vsel %vm400, %v522, %v515
    %524 = vrot.lane.b32.xlu0 %v137, 96
    %v525 = vpop.permute.xlu0 %524
    %526 = vrot.lane.b32.xlu0 %v138, 96
    %v527 = vpop.permute.xlu0 %526
    %528 = vrot.lane.b32.xlu0 %v139, 96
    %v529 = vpop.permute.xlu0 %528
    %530 = vrot.lane.b32.xlu0 %v140, 96
    %v531 = vpop.permute.xlu0 %530
    %v536 = vsel %vm54, %v523, 0
    %538 = vmatpush.msra.mxu0 0.0
    %539 = vmatpush.msra.mxu0 0.0
    %540 = vmatpush.msra.mxu0 0.0
    %541 = vmatpush.msra.mxu0 0.0
    %542 = vmatpush.msra.mxu0 0.0
    %543 = vmatpush.msra.mxu0 0.0
    %544 = vmatpush.msra.mxu0 0.0
    %545 = vmatpush.msra.mxu0 0.0
    %546 = vmatpush.msra.mxu0 0.0
    %547 = vmatpush.msra.mxu0 0.0
    %548 = vmatpush.msra.mxu0 0.0
    %549 = vmatpush.msra.mxu0 0.0
    %550 = vmatpush.msra.mxu0 %v531
    %551 = vmatpush.msra.mxu0 %v529
    %552 = vmatpush.msra.mxu0 %v527
    %553 = vmatpush.msra.mxu0 %v525
    %554 = vmatmul.f32.gmra.mxu0 %v536
    %v555 = vpop.f32.mrf.mxu0
    %v556 = vadd.f32 0.0, %v555
    %557 = vdwg.mxu0
    %v558 = vperm.slane %v556, 0
    %v559 = vlaneseq
    %v560 = vshrl.u32 %v559, 7
    %562 = vset.pattern.permute.xlu0 %v560
    %563 = vperm.xlu0 %562, %v558
    %v564 = vpop.permute.xlu0 %563
    %v565 = vlaneseq
    %v566 = vshrl.u32 %v565, 7
    %v567 = vadd.s32 %v566, 8
    %568 = vset.pattern.permute.xlu0 %v567
    %569 = vperm.xlu0 %568, %v558
    %v570 = vpop.permute.xlu0 %569
    %v571 = vlaneseq
    %v572 = vshrl.u32 %v571, 7
    %v573 = vadd.s32 %v572, 16
    %574 = vset.pattern.permute.xlu0 %v573
    %575 = vperm.xlu0 %574, %v558
    %v576 = vpop.permute.xlu0 %575
    %v577 = vlaneseq
    %v578 = vshrl.u32 %v577, 7
    %v579 = vadd.s32 %v578, 24
    %580 = vset.pattern.permute.xlu0 %v579
    %581 = vperm.xlu0 %580, %v558
    %v582 = vpop.permute.xlu0 %581
    %v583 = vperm.slane %v556, 1
    %v584 = vlaneseq
    %v585 = vshrl.u32 %v584, 7
    %587 = vset.pattern.permute.xlu0 %v585
    %588 = vperm.xlu0 %587, %v583
    %v589 = vpop.permute.xlu0 %588
    %v590 = vlaneseq
    %v591 = vshrl.u32 %v590, 7
    %v592 = vadd.s32 %v591, 8
    %593 = vset.pattern.permute.xlu0 %v592
    %594 = vperm.xlu0 %593, %v583
    %v595 = vpop.permute.xlu0 %594
    %v596 = vlaneseq
    %v597 = vshrl.u32 %v596, 7
    %v598 = vadd.s32 %v597, 16
    %599 = vset.pattern.permute.xlu0 %v598
    %600 = vperm.xlu0 %599, %v583
    %v601 = vpop.permute.xlu0 %600
    %v602 = vlaneseq
    %v603 = vshrl.u32 %v602, 7
    %v604 = vadd.s32 %v603, 24
    %605 = vset.pattern.permute.xlu0 %v604
    %606 = vperm.xlu0 %605, %v583
    %v607 = vpop.permute.xlu0 %606
    %v608 = vadd.f32 %v195, %v564
    %v609 = vadd.f32 %v198, %v570
    %v610 = vadd.f32 %v201, %v576
    %v611 = vadd.f32 %v204, %v582
    %v612 = vadd.f32 %v236, %v589
    %v613 = vadd.f32 %v239, %v595
    %v614 = vadd.f32 %v242, %v601
    %v615 = vadd.f32 %v245, %v607
    %v616 = vtanh.pop %v608
    %v617 = vtanh.pop %v609
    %v618 = vtanh.pop %v610
    %v619 = vtanh.pop %v611
    %v620 = vtanh.pop %v612
    %v621 = vtanh.pop %v613
    %v622 = vtanh.pop %v614
    %v623 = vtanh.pop %v615
    %624 = vset.pattern.permute.xlu0 65
    %625 = vperm.xlu0 %624, %v133
    %v626 = vpop.permute.xlu0 %625
    %628 = vset.pattern.permute.xlu0 65
    %629 = vperm.xlu0 %628, %v134
    %v630 = vpop.permute.xlu0 %629
    %632 = vset.pattern.permute.xlu0 65
    %633 = vperm.xlu0 %632, %v135
    %v634 = vpop.permute.xlu0 %633
    %636 = vset.pattern.permute.xlu0 65
    %637 = vperm.xlu0 %636, %v136
    %v638 = vpop.permute.xlu0 %637
    %v640 = vmul.f32 %v616, %v626
    %v641 = vmul.f32 %v617, %v630
    %v642 = vmul.f32 %v618, %v634
    %v643 = vmul.f32 %v619, %v638
    %v644 = vmul.f32 %v620, %v626
    %v645 = vmul.f32 %v621, %v630
    %v646 = vmul.f32 %v622, %v634
    %v647 = vmul.f32 %v623, %v638
    %v648 = vsel %vm371, %v640, 0.0
    %v649 = vsel %vm371, %v641, 0.0
    %v650 = vadd.f32 %v648, %v649
    %v651 = vsel %vm371, %v642, 0.0
    %v652 = vadd.f32 %v650, %v651
    %v653 = vsel %vm371, %v643, 0.0
    %v654 = vadd.f32 %v652, %v653
    %v655 = vrot.slane %v654, 4
    %v656 = vadd.f32 %v654, %v655
    %v657 = vrot.slane %v656, 2
    %v658 = vadd.f32 %v656, %v657
    %v659 = vrot.slane %v658, 1
    %v660 = vadd.f32 %v658, %v659
    %v661 = vsel %vm371, %v644, 0.0
    %v662 = vsel %vm371, %v645, 0.0
    %v663 = vadd.f32 %v661, %v662
    %v664 = vsel %vm371, %v646, 0.0
    %v665 = vadd.f32 %v663, %v664
    %v666 = vsel %vm371, %v647, 0.0
    %v667 = vadd.f32 %v665, %v666
    %v668 = vrot.slane %v667, 4
    %v669 = vadd.f32 %v667, %v668
    %v670 = vrot.slane %v669, 2
    %v671 = vadd.f32 %v669, %v670
    %v672 = vrot.slane %v671, 1
    %v673 = vadd.f32 %v671, %v672
    %v676 = vsel %vm400, %v673, %v660
    %678 = vst.msk [vmem:[#allocation5] sm:$0x3] %vm403, %v676
    // Predicated region
    $region26: #{pointer_forward.1} parent=1 // pred_check
      _
    $region27: #{pointer_forward.1} parent=1 // pred_check_branch
      %680 = sbr.rel (0) target = $region29
    $region28: #{pointer_forward.1} parent=1 // pred_region
      %682 = vsyncadd [#allocation4], 0
      %s684 = sshll.u32 [#allocation5], 4
      %s685 = int_to_ptr.vmem [resolvable:$true] %s684
      %s686 = sshll.u32 %s5, 4
      %s687 = int_to_ptr.hbm [resolvable:$true] %s686
      %689 = dma.vmem_to_hbm [thread:$0]  %s685, 32, %s687, [#allocation4]
    $region29: #{pointer_forward.1} parent=1 // pred_fallthru
      _
    // Predicated region
    $region30: #{pointer_forward.1} parent=1 // pred_check
      _
    $region31: #{pointer_forward.1} parent=1 // pred_check_branch
      %691 = sbr.rel (0) target = $region33
    $region32: #{pointer_forward.1} parent=1 // pred_region
      _
    $region33: #{pointer_forward.1} parent=1 // pred_fallthru
      _
    // Predicated region
    $region34: #{pointer_forward.1} parent=1 // pred_check
      _
    $region35: #{pointer_forward.1} parent=1 // pred_check_branch
      %693 = sbr.rel (0) target = $region37
    $region36: #{pointer_forward.1} parent=1 // pred_region
      %695 = dma.done [#allocation4], 32
    $region37: #{pointer_forward.1} parent=1 // pred_fallthru
      _
    // Predicated region
    $region38: #{pointer_forward.1} parent=1 // pred_check
      _
    $region39: #{pointer_forward.1} parent=1 // pred_check_branch
      %697 = sbr.rel (0) target = $region41
    $region40: #{pointer_forward.1} parent=1 // pred_region
      _
    $region41: #{pointer_forward.1} parent=1 // pred_fallthru
      _
    %698 = vsyncpa [#allocation3], 1
    %699 = vsyncpa [#allocation4], 1

</llo_original>
